<compile_context>
chip_gen: v5e
topology: v5e:2x2
jax: 0.10.0
libtpu: 0.0.40
codegen_flags: <defaults>
</compile_context>

<pallas_src>
import math

import jax
import jax.numpy as jnp
from jax.experimental import pallas as pl
from jax.experimental.pallas import tpu as pltpu


def _round_up(x, m):
    return ((x + m - 1) // m) * m


def _phys_vmem_bytes():
    try:
        return int(getattr(pltpu.get_tpu_info(), "vmem_capacity_bytes", 64 << 20))
    except Exception:  # pragma: no cover - conservative fallback (v7x size)
        return 64 << 20


def _mlp_kernel_factory(num_layers):
    """Kernel applying `num_layers` Linear(d, d) layers back-to-back (no activation)."""

    if num_layers == 1:
        def kernel(x_ref, w_ref, b_ref, o_ref):
            h = jnp.dot(x_ref[...], w_ref[0], preferred_element_type=jnp.float32)
            o_ref[...] = (h + b_ref[0]).astype(o_ref.dtype)
        return kernel

    def kernel(x_ref, w_ref, b_ref, o_ref, y_ref):
        # x_ref: (TB, Dp) bf16       input tile (already compute dtype)
        # w_ref: (L, Dp, Dp) bf16    weights, [in, out] layout
        # b_ref: (L, 1, Dp) f32      biases
        # o_ref: (TB, Dp)            output tile
        # y_ref: (TB, Dp) bf16       VMEM scratch for inter-layer activations
        h = jnp.dot(x_ref[...], w_ref[0],
                    preferred_element_type=jnp.float32) + b_ref[0]
        for layer in range(1, num_layers):  # static unroll; L is small
            # Route the inter-layer activation through VMEM scratch in bf16: keeps a
            # big f32 activation from living in vregs across all L dots.
            y_ref[...] = h.astype(y_ref.dtype)
            h = jnp.dot(y_ref[...], w_ref[layer],
                        preferred_element_type=jnp.float32) + b_ref[layer]
        o_ref[...] = h.astype(o_ref.dtype)

    return kernel


def _vmem_limit_bytes(num_layers, d_pad, tile_batch, in_dtype, out_dtype,
                      compute_dtype, weight_buffers):
    """VMEM budget with headroom, clamped to the local chip's physical capacity."""
    cb = jnp.dtype(compute_dtype).itemsize
    w_bytes = weight_buffers * num_layers * d_pad * d_pad * cb
    b_bytes = weight_buffers * num_layers * d_pad * 4
    io_bytes = 2 * tile_batch * d_pad * (jnp.dtype(in_dtype).itemsize
                                         + jnp.dtype(out_dtype).itemsize)
    scratch_bytes = tile_batch * d_pad * cb
    need = w_bytes + b_bytes + io_bytes + scratch_bytes
    limit = int(need * 1.25) + (4 << 20)
    limit = max(limit, 32 << 20)
    limit = min(limit, int(_phys_vmem_bytes() * 0.9))
    return limit


def _build_pallas_call(num_layers, d_pad, tile_batch, n_tiles, batch, out_dtype,
                       compute_dtype, vmem_limit, weights_pipeline_mode):
    kernel = _mlp_kernel_factory(num_layers)

    def const_spec(shape):
        kwargs = {}
        if weights_pipeline_mode is not None:
            # Weights/biases are grid-invariant: double-buffering them wastes VMEM.
            kwargs["pipeline_mode"] = weights_pipeline_mode
        return pl.BlockSpec(shape, lambda i: (0,) * len(shape), **kwargs)

    scratch = ([] if num_layers == 1
               else [pltpu.VMEM((tile_batch, d_pad), compute_dtype)])

    return pl.pallas_call(
        kernel,
        # Output batch dim is NOT padded: Pallas masks the ragged last block.
        out_shape=jax.ShapeDtypeStruct((batch, d_pad), out_dtype),
        grid_spec=pltpu.PrefetchScalarGridSpec(
            num_scalar_prefetch=0,
            grid=(n_tiles,),
            in_specs=[
                pl.BlockSpec((tile_batch, d_pad), lambda i: (i, 0)),   # x tile (bf16)
                const_spec((num_layers, d_pad, d_pad)),                # all weights
                const_spec((num_layers, 1, d_pad)),                    # all biases
            ],
            out_specs=pl.BlockSpec((tile_batch, d_pad), lambda i: (i, 0)),
            scratch_shapes=scratch,
        ),
        compiler_params=pltpu.CompilerParams(
            dimension_semantics=("parallel",),   # batch axis shards across TCs (v7x)
            vmem_limit_bytes=vmem_limit,
        ),
    )


_BUFFERED_WEIGHTS_OK = None  # cache: does this jax build accept Buffered(1) here?


def _run_layer_group(xp, w_g, b_g, tile_batch, n_tiles, out_dtype, compute_dtype):
    global _BUFFERED_WEIGHTS_OK
    num_layers, d_pad, _ = w_g.shape
    batch = xp.shape[0]

    jitted = None
    if _BUFFERED_WEIGHTS_OK is not False and getattr(pl, "Buffered", None) is not None:
        try:
            limit = _vmem_limit_bytes(num_layers, d_pad, tile_batch, xp.dtype,
                                      out_dtype, compute_dtype, weight_buffers=1)
            probe = jax.jit(_build_pallas_call(
                num_layers, d_pad, tile_batch, n_tiles, batch, out_dtype,
                compute_dtype, limit, pl.Buffered(1)))
            if _BUFFERED_WEIGHTS_OK is not True:
                probe.lower(xp, w_g, b_g)      # probe pipeline_mode acceptance only
                _BUFFERED_WEIGHTS_OK = True
            jitted = probe
        except (TypeError, ValueError, NotImplementedError, pltpu.LoweringException):
            # Narrow guard: only the Buffered(1) construction/lowering probe is
            # caught; genuine compile/runtime errors below propagate normally.
            _BUFFERED_WEIGHTS_OK = False

    if jitted is None:  # default double-buffering fallback
        limit = _vmem_limit_bytes(num_layers, d_pad, tile_batch, xp.dtype,
                                  out_dtype, compute_dtype, weight_buffers=2)
        jitted = jax.jit(_build_pallas_call(
            num_layers, d_pad, tile_batch, n_tiles, batch, out_dtype,
            compute_dtype, limit, None))

    return jitted(xp, w_g, b_g)   # executed OUTSIDE any try/except


def _layer_groups(num_layers, d_pad, tile_batch, out_dtype, compute_dtype):
    """Split the layer stack so each call's resident weights fit VMEM (v7x: 64 MiB)."""
    cb = jnp.dtype(compute_dtype).itemsize
    per_layer = d_pad * d_pad * cb + d_pad * 4
    io = (2 * tile_batch * d_pad * (cb + jnp.dtype(out_dtype).itemsize)
          + tile_batch * d_pad * cb)
    budget = int(_phys_vmem_bytes() * 0.45) - io
    max_layers = max(1, budget // per_layer)
    groups, remaining = [], num_layers
    while remaining > 0:
        g = int(min(remaining, max_layers))
        groups.append(g)
        remaining -= g
    return groups


def _pick_tile_batch(batch, tile_batch):
    if tile_batch is None:
        # Big tiles amortize the ~0.35us/grid-step overhead (kernel is HBM-bound),
        # but keep >=4 grid steps at large B so the "parallel" batch axis both
        # shards across 2 TensorCores (v7x) and still pipelines within each core.
        tile_batch = max(128, min(1024, _round_up(pl.cdiv(batch, 4), 16)))
    if tile_batch >= batch:
        return batch, 1                       # single full-extent block: always legal
    tile_batch = _round_up(tile_batch, 16)    # bf16 sublane packing
    if tile_batch >= batch:
        return batch, 1
    return tile_batch, pl.cdiv(batch, tile_batch)


def prepare_lazy_mlp_params(weights_pt, biases, *, compute_dtype=jnp.bfloat16,
                            lane_multiple=128):
    """One-time parameter prep (do NOT redo per forward call).

    Transposes PyTorch [out, in] weights to [in, out], pads the feature dim up to a
    lane multiple (128) and casts weights to the MXU compute dtype (bf16).  Biases
    stay f32 for the f32 accumulate + bias add.
    """
    num_layers, d_out, d_in = weights_pt.shape
    assert d_out == d_in, "sequential Linear(d, d) stack requires square weights"
    d = d_in
    d_pad = _round_up(max(d, lane_multiple), lane_multiple)
    w_io = jnp.transpose(weights_pt, (0, 2, 1))                      # [L, in, out]
    w_io = jnp.pad(w_io, ((0, 0), (0, d_pad - d), (0, d_pad - d)))
    w_io = w_io.astype(compute_dtype)
    b = jnp.pad(biases, ((0, 0), (0, d_pad - d))).astype(jnp.float32)
    return w_io, b.reshape(num_layers, 1, d_pad)


def lazy_mlp_forward(x, w_io, b, *, tile_batch=None, out_dtype=None):
    """LazyMLP forward: x -> Linear_0 -> ... -> Linear_{L-1} (no activations).

    Args:
      x:       [B, D] input (cast to bf16 at the call boundary).
      w_io:    [L, Dp, Dp] prepared weights ([in, out] layout, feature-padded, bf16).
      b:       [L, 1, Dp] prepared biases (f32).
      out_dtype: output dtype (default x.dtype).  Pass jnp.bfloat16 to halve output
        HBM traffic if downstream tolerates it.
    Returns:
      [B, D] output.
    """
    B, D = x.shape
    L, Dp, Dp2 = w_io.shape
    assert Dp == Dp2 and Dp % 128 == 0 and Dp >= D
    assert b.shape == (L, 1, Dp)
    compute_dtype = w_io.dtype
    out_dtype = x.dtype if out_dtype is None else out_dtype

    tile_batch, n_tiles = _pick_tile_batch(B, tile_batch)

    # Pad the feature dim only when needed (lane-dense loads/stores) and cast the
    # activations to bf16 once at the boundary.  The kernel's first dot already ran
    # in bf16, so this is numerically identical but halves input HBM bytes.
    xp = x
    if Dp != D:
        xp = jnp.pad(x, ((0, 0), (0, Dp - D)))
    if xp.dtype != compute_dtype:
        xp = xp.astype(compute_dtype)

    h = xp
    start = 0
    groups = _layer_groups(L, Dp, tile_batch, out_dtype, compute_dtype)
    for gi, g in enumerate(groups):
        last = gi == len(groups) - 1
        # Inter-group activations stay bf16 (== the fused kernel's per-layer bf16
        # round-trip), so chaining groups is numerically identical to one big call.
        g_out = out_dtype if last else compute_dtype
        h = _run_layer_group(h, w_io[start:start + g], b[start:start + g],
                             tile_batch, n_tiles, g_out, compute_dtype)
        start += g

    return h if Dp == D else h[:, :D]


def init_lazy_mlp_params(key, output_sizes):
    """Deterministic init matching nn.Linear default (uniform +-1/sqrt(fan_in))."""
    D = output_sizes[0]
    assert all(s == D for s in output_sizes), "sequential Linear(d, d) stack"
    L = len(output_sizes)
    bound = 1.0 / math.sqrt(D)
    kw, kb = jax.random.split(key)
    weights = jax.random.uniform(
        kw, (L, D, D), minval=-bound, maxval=bound, dtype=jnp.float32
    )  # PyTorch convention: W[layer, out, in]
    biases = jax.random.uniform(
        kb, (L, D), minval=-bound, maxval=bound, dtype=jnp.float32
    )
    return weights, biases


def lazy_mlp_reference(x, w_io_prepared, b_prepared, d_out):
    """Pure-JAX reference matching the kernel's bf16-input / f32-accumulate math."""
    L, Dp, _ = w_io_prepared.shape
    B, D = x.shape
    compute_dtype = w_io_prepared.dtype
    y = jnp.pad(x, ((0, 0), (0, Dp - D))).astype(jnp.float32)
    for layer in range(L):
        w = w_io_prepared[layer].astype(jnp.float32)
        y = y.astype(compute_dtype).astype(jnp.float32) @ w + b_prepared[layer]
    return y[:, :d_out].astype(x.dtype)


if __name__ == "__main__":
    key = jax.random.PRNGKey(0)
    k_x1, k_x2, k_x3, k_p1, k_p2 = jax.random.split(key, 5)

    # Case 1: lane-aligned D, multi-step batch grid (pipelining + 2-TC sharding).
    B1, D1, L1 = 512, 128, 3
    x1 = jax.random.normal(k_x1, (B1, D1), dtype=jnp.float32)
    w1, b1 = init_lazy_mlp_params(k_p1, [D1] * L1)
    w1p, b1p = prepare_lazy_mlp_params(w1, b1)
    out1 = jax.block_until_ready(lazy_mlp_forward(x1, w1p, b1p))
    ref1 = lazy_mlp_reference(x1, w1p, b1p, D1)
    assert out1.shape == (B1, D1)
    assert jnp.allclose(out1, ref1, atol=2e-3, rtol=2e-3), "mismatch vs reference (case 1)"

    # Case 2: small toy shape (D=32) exercising the feature-padding path.
    B2, D2, L2 = 8, 32, 3
    x2 = jax.random.normal(k_x2, (B2, D2), dtype=jnp.float32)
    w2, b2 = init_lazy_mlp_params(k_p2, [D2] * L2)
    w2p, b2p = prepare_lazy_mlp_params(w2, b2)
    out2 = jax.block_until_ready(lazy_mlp_forward(x2, w2p, b2p))
    ref2 = lazy_mlp_reference(x2, w2p, b2p, D2)
    assert out2.shape == (B2, D2)
    assert jnp.allclose(out2, ref2, atol=2e-3, rtol=2e-3), "mismatch vs reference (case 2)"

    # Case 3: ragged batch (B % tile_batch != 0) exercising Pallas's masked last block
    # (no wrapper-side batch padding / output slicing anymore).
    B3, D3, L3 = 300, 128, 2
    x3 = jax.random.normal(k_x3, (B3, D3), dtype=jnp.float32)
    w3p, b3p = w1p[:L3], b1p[:L3]
    out3 = jax.block_until_ready(lazy_mlp_forward(x3, w3p, b3p))
    ref3 = lazy_mlp_reference(x3, w3p, b3p, D3)
    assert out3.shape == (B3, D3)
    assert jnp.allclose(out3, ref3, atol=2e-3, rtol=2e-3), "mismatch vs reference (case 3)"

    print("KERNEL_OK")
</pallas_src>

<mosaic_0001>
module attributes {stable_mosaic.version = 11 : i64} {
  func.func @kernel(%arg0: i32, %arg1: memref<128x128xbf16, #tpu.memory_space<vmem>>, %arg2: memref<3x128x128xbf16, #tpu.memory_space<vmem>>, %arg3: memref<3x1x128xf32, #tpu.memory_space<vmem>>, %arg4: memref<128x128xf32, #tpu.memory_space<vmem>>, %arg5: memref<128x128xbf16, #tpu.memory_space<vmem>>) attributes {dimension_semantics = [#tpu.dimension_semantics<parallel>], iteration_bounds = array<i64: 4>, scalar_prefetch = 0 : i64, scratch_operands = 1 : i64, tpu.core_type = #tpu.core_type<tc>, window_params = [{transform_indices = @transform_0, window_bounds = array<i64: 128, 128>}, {pipeline_mode = #tpu.pipeline_mode<synchronous>, transform_indices = @transform_1, window_bounds = array<i64: 3, 128, 128>}, {pipeline_mode = #tpu.pipeline_mode<synchronous>, transform_indices = @transform_2, window_bounds = array<i64: 3, 1, 128>}, {transform_indices = @transform_3, window_bounds = array<i64: 128, 128>}]} {
    %c0 = arith.constant 0 : index
    %c0_0 = arith.constant 0 : index
    %0 = vector.load %arg1[%c0, %c0_0] : memref<128x128xbf16, #tpu.memory_space<vmem>>, vector<128x128xbf16>
    %c0_1 = arith.constant 0 : index
    %c0_2 = arith.constant 0 : index
    %c0_3 = arith.constant 0 : index
    %1 = vector.load %arg2[%c0_1, %c0_2, %c0_3] : memref<3x128x128xbf16, #tpu.memory_space<vmem>>, vector<1x128x128xbf16>
    %2 = vector.shape_cast %1 : vector<1x128x128xbf16> to vector<128x128xbf16>
    %cst = arith.constant dense<0.000000e+00> : vector<128x128xf32>
    %3 = tpu.matmul %0, %2, %cst {dimension_numbers = #tpu.dot_dimension_numbers<[1], [0], [0], [1], [0, 0, 1, 1], [], []>} : vector<128x128xbf16>, vector<128x128xbf16>, vector<128x128xf32> -> vector<128x128xf32>
    %c0_4 = arith.constant 0 : index
    %c0_5 = arith.constant 0 : index
    %c0_6 = arith.constant 0 : index
    %4 = vector.load %arg3[%c0_4, %c0_5, %c0_6] : memref<3x1x128xf32, #tpu.memory_space<vmem>>, vector<1x1x128xf32>
    %5 = vector.shape_cast %4 : vector<1x1x128xf32> to vector<1x128xf32>
    %6 = vector.broadcast %5 : vector<1x128xf32> to vector<128x128xf32>
    %7 = arith.addf %3, %6 : vector<128x128xf32>
    %8 = arith.truncf %7 : vector<128x128xf32> to vector<128x128xbf16>
    %c0_7 = arith.constant 0 : index
    %c0_8 = arith.constant 0 : index
    %9 = vector.load %arg5[%c0_7, %c0_8] : memref<128x128xbf16, #tpu.memory_space<vmem>>, vector<128x128xbf16>
    tpu.vector_store %arg5[%c0_7, %c0_8], %8 {strides = array<i32>} : memref<128x128xbf16, #tpu.memory_space<vmem>>, vector<128x128xbf16>,
    %c0_9 = arith.constant 0 : index
    %c0_10 = arith.constant 0 : index
    %10 = vector.load %arg5[%c0_9, %c0_10] : memref<128x128xbf16, #tpu.memory_space<vmem>>, vector<128x128xbf16>
    %c1 = arith.constant 1 : index
    %c0_11 = arith.constant 0 : index
    %c0_12 = arith.constant 0 : index
    %11 = vector.load %arg2[%c1, %c0_11, %c0_12] : memref<3x128x128xbf16, #tpu.memory_space<vmem>>, vector<1x128x128xbf16>
    %12 = vector.shape_cast %11 : vector<1x128x128xbf16> to vector<128x128xbf16>
    %cst_13 = arith.constant dense<0.000000e+00> : vector<128x128xf32>
    %13 = tpu.matmul %10, %12, %cst_13 {dimension_numbers = #tpu.dot_dimension_numbers<[1], [0], [0], [1], [0, 0, 1, 1], [], []>} : vector<128x128xbf16>, vector<128x128xbf16>, vector<128x128xf32> -> vector<128x128xf32>
    %c1_14 = arith.constant 1 : index
    %c0_15 = arith.constant 0 : index
    %c0_16 = arith.constant 0 : index
    %14 = vector.load %arg3[%c1_14, %c0_15, %c0_16] : memref<3x1x128xf32, #tpu.memory_space<vmem>>, vector<1x1x128xf32>
    %15 = vector.shape_cast %14 : vector<1x1x128xf32> to vector<1x128xf32>
    %16 = vector.broadcast %15 : vector<1x128xf32> to vector<128x128xf32>
    %17 = arith.addf %13, %16 : vector<128x128xf32>
    %18 = arith.truncf %17 : vector<128x128xf32> to vector<128x128xbf16>
    %c0_17 = arith.constant 0 : index
    %c0_18 = arith.constant 0 : index
    %19 = vector.load %arg5[%c0_17, %c0_18] : memref<128x128xbf16, #tpu.memory_space<vmem>>, vector<128x128xbf16>
    tpu.vector_store %arg5[%c0_17, %c0_18], %18 {strides = array<i32>} : memref<128x128xbf16, #tpu.memory_space<vmem>>, vector<128x128xbf16>,
    %c0_19 = arith.constant 0 : index
    %c0_20 = arith.constant 0 : index
    %20 = vector.load %arg5[%c0_19, %c0_20] : memref<128x128xbf16, #tpu.memory_space<vmem>>, vector<128x128xbf16>
    %c2 = arith.constant 2 : index
    %c0_21 = arith.constant 0 : index
    %c0_22 = arith.constant 0 : index
    %21 = vector.load %arg2[%c2, %c0_21, %c0_22] : memref<3x128x128xbf16, #tpu.memory_space<vmem>>, vector<1x128x128xbf16>
    %22 = vector.shape_cast %21 : vector<1x128x128xbf16> to vector<128x128xbf16>
    %cst_23 = arith.constant dense<0.000000e+00> : vector<128x128xf32>
    %23 = tpu.matmul %20, %22, %cst_23 {dimension_numbers = #tpu.dot_dimension_numbers<[1], [0], [0], [1], [0, 0, 1, 1], [], []>} : vector<128x128xbf16>, vector<128x128xbf16>, vector<128x128xf32> -> vector<128x128xf32>
    %c2_24 = arith.constant 2 : index
    %c0_25 = arith.constant 0 : index
    %c0_26 = arith.constant 0 : index
    %24 = vector.load %arg3[%c2_24, %c0_25, %c0_26] : memref<3x1x128xf32, #tpu.memory_space<vmem>>, vector<1x1x128xf32>
    %25 = vector.shape_cast %24 : vector<1x1x128xf32> to vector<1x128xf32>
    %26 = vector.broadcast %25 : vector<1x128xf32> to vector<128x128xf32>
    %27 = arith.addf %23, %26 : vector<128x128xf32>
    %c0_27 = arith.constant 0 : index
    %c0_28 = arith.constant 0 : index
    %28 = vector.load %arg4[%c0_27, %c0_28] : memref<128x128xf32, #tpu.memory_space<vmem>>, vector<128x128xf32>
    tpu.vector_store %arg4[%c0_27, %c0_28], %27 {strides = array<i32>} : memref<128x128xf32, #tpu.memory_space<vmem>>, vector<128x128xf32>,
    return
  }
  func.func @transform_0(%arg0: i32) -> (i32, i32) {
    %c0_i32 = arith.constant 0 : i32
    %c0_i32_0 = arith.constant 0 : i32
    return %arg0, %c0_i32 : i32, i32
  }
  func.func @transform_1(%arg0: i32) -> (i32, i32, i32) {
    %c0_i32 = arith.constant 0 : i32
    %c0_i32_0 = arith.constant 0 : i32
    %c0_i32_1 = arith.constant 0 : i32
    %c0_i32_2 = arith.constant 0 : i32
    return %c0_i32, %c0_i32_0, %c0_i32_1 : i32, i32, i32
  }
  func.func @transform_2(%arg0: i32) -> (i32, i32, i32) {
    %c0_i32 = arith.constant 0 : i32
    %c0_i32_0 = arith.constant 0 : i32
    %c0_i32_1 = arith.constant 0 : i32
    %c0_i32_2 = arith.constant 0 : i32
    return %c0_i32, %c0_i32_0, %c0_i32_1 : i32, i32, i32
  }
  func.func @transform_3(%arg0: i32) -> (i32, i32) {
    %c0_i32 = arith.constant 0 : i32
    %c0_i32_0 = arith.constant 0 : i32
    return %arg0, %c0_i32 : i32, i32
  }
}

</mosaic_0001>

<llo_original>
// kernel: tpu_custom_call.1
$region0: #{tpu_custom_call.1}
  #allocation0 [shape = 'u32[]', space=smem, size = 0x4, offset = 0x4, fixed_abs, tag = 'smem constant byte address 0x4 - core index']
  #allocation1 [shape = 'u32[72,128]{1,0:T(1,128)}', space=vmem, size = 0x9000, scoped, tag = 'internal scratch']
  #allocation2 [shape = 'bf16[128,128]{1,0:T(8,128)(2,1)}', space=vmem, size = 0x8000, scoped, tag = 'scratch operand']
  %s0 = inlined_call_operand.hbm [shape: bf16[512,128], index: 0, kind: input, shape index: {}]
  %s1 = inlined_call_operand.hbm [shape: bf16[3,128,128], index: 1, kind: input, shape index: {}]
  %s2 = inlined_call_operand.hbm [shape: f32[3,1,128], index: 2, kind: input, shape index: {}]
  %s3 = inlined_call_operand.hbm [shape: f32[512,128], index: 3, kind: output, shape index: {}]
  %s4 = sld [smem:[#allocation0]]
  $region57: #{tpu_custom_call.1} parent=0
    _
  %s6 = ssub.s32 1, %s4
  %s7 = scalar_select 0, %s6, %s4
  $region1: #{tpu_custom_call.1} parent=0
    #allocation3 [shape = 'u8[65536]{0}', space=vmem, size = 0x10000, scoped, tag = 'input window, operand 0']
    #allocation4 [shape = 's32[2]{0}', space=sflag, size = 0x8, scoped, tag = 'scoped memory for tpu_custom_call.1']
    #allocation5 [shape = 's32[2]{0}', space=sflag, size = 0x8, scoped, tag = 'scoped memory for tpu_custom_call.1']
    #allocation6 [shape = 'u8[98304]{0}', space=vmem, size = 0x18000, scoped, tag = 'input window, operand 1, single buffered']
    #allocation7 [shape = 's32[1]{0}', space=sflag, size = 0x4, scoped, tag = 'scoped memory for tpu_custom_call.1']
    #allocation8 [shape = 'u8[1536]{0}', space=vmem, size = 0x800, scoped, tag = 'input window, operand 2, single buffered']
    #allocation9 [shape = 'u8[131072]{0}', space=vmem, size = 0x20000, scoped, tag = 'output window, operand 0']
    %8 = vsyncpa [#allocation4], 0
    %s9 = scalar_lea.sflag [#allocation4], 1
    %10 = vsyncpa %s9, 0
    %11 = vsyncpa [#allocation7], 0
    %12 = vsyncpa [#allocation5], 0
    %s13 = scalar_lea.sflag [#allocation5], 1
    %14 = vsyncpa %s13, 0
    loop: start=0, step=1, limit=6
    $region2: #{tpu_custom_call.1} parent=1 // loop_pre_header
      _
    $region3: #{tpu_custom_call.1} parent=1 // loop_header
      %s16 = sphi 0, %s20
      %p17 = scmp.ge.s32.totalorder %s16, 6
      %s26 = sphi 0, %s28
      %s29 = sphi 0, %s26
      %s30 = sphi 0, %s29
      %s46 = sphi 0, %s30
      %s50 = sphi 0, %s50
      %s52 = sphi 0, %s50
      %s53 = sphi 0, %s52
      %s67 = sphi 0, %s53
      %s71 = sphi 0, %s71
      %s73 = sphi 0, %s71
      %s74 = sphi 0, %s73
      %s88 = sphi 0, %s74
      %s94 = sphi 0, %s96
      %s97 = sphi 0, %s94
      %s98 = sphi 0, %s97
      %s114 = sphi 0, %s98
    $region4: #{tpu_custom_call.1} parent=1 // loop_header_branch
      %19 = sbr.rel (%p17) target = $region8
    $region5: #{tpu_custom_call.1} parent=1 // loop_body
      %s21 = ssub.s32 %s16, 1
      %s22 = ssub.s32 %s16, 2
      %s23 = sadd.s32 %s16, 1
      %s24 = ssub.s32 %s16, %s23
      %p25 = scmp.eq.s32.totalorder %s24, 0
      %s27 = sadd.s32 %s26, 1
      %s28 = scalar_select %p25, %s26, %s27
      %p31 = pneg %p25
      %p32 = scmp.eq.s32.totalorder %s16, 3
      %p33 = por %p31, %p32
      %p34 = scmp.ne.s32.totalorder %s26, %s29
      %p35 = scmp.eq.s32.totalorder %s16, 0
      %p36 = por %p34, %p35
      %p37 = scmp.ne.s32.totalorder %s26, %s29
      %p38 = scmp.eq.s32.totalorder %s21, 3
      %p39 = por %p37, %p38
      %p40 = scmp.ne.s32.totalorder %s29, %s30
      %p41 = scmp.eq.s32.totalorder %s21, 0
      %p42 = por %p40, %p41
      %p43 = scmp.ne.s32.totalorder %s29, %s30
      %p44 = scmp.eq.s32.totalorder %s22, 3
      %p45 = por %p43, %p44
      %p47 = scmp.ne.s32.totalorder %s30, %s46
      %p48 = scmp.eq.s32.totalorder %s22, 0
      %p49 = por %p47, %p48
      %s51 = sadd.s32 %s50, 1
      %p54 = scmp.eq.s32.totalorder %s16, 3
      %p55 = scmp.ne.s32.totalorder %s50, %s52
      %p56 = scmp.eq.s32.totalorder %s16, 0
      %p57 = por %p55, %p56
      %p58 = scmp.ne.s32.totalorder %s50, %s52
      %p59 = scmp.eq.s32.totalorder %s21, 3
      %p60 = por %p58, %p59
      %p61 = scmp.ne.s32.totalorder %s52, %s53
      %p62 = scmp.eq.s32.totalorder %s21, 0
      %p63 = por %p61, %p62
      %p64 = scmp.ne.s32.totalorder %s52, %s53
      %p65 = scmp.eq.s32.totalorder %s22, 3
      %p66 = por %p64, %p65
      %p68 = scmp.ne.s32.totalorder %s53, %s67
      %p69 = scmp.eq.s32.totalorder %s22, 0
      %p70 = por %p68, %p69
      %s72 = sadd.s32 %s71, 1
      %p75 = scmp.eq.s32.totalorder %s16, 3
      %p76 = scmp.ne.s32.totalorder %s71, %s73
      %p77 = scmp.eq.s32.totalorder %s16, 0
      %p78 = por %p76, %p77
      %p79 = scmp.ne.s32.totalorder %s71, %s73
      %p80 = scmp.eq.s32.totalorder %s21, 3
      %p81 = por %p79, %p80
      %p82 = scmp.ne.s32.totalorder %s73, %s74
      %p83 = scmp.eq.s32.totalorder %s21, 0
      %p84 = por %p82, %p83
      %p85 = scmp.ne.s32.totalorder %s73, %s74
      %p86 = scmp.eq.s32.totalorder %s22, 3
      %p87 = por %p85, %p86
      %p89 = scmp.ne.s32.totalorder %s74, %s88
      %p90 = scmp.eq.s32.totalorder %s22, 0
      %p91 = por %p89, %p90
      %s92 = ssub.s32 %s16, %s23
      %p93 = scmp.eq.s32.totalorder %s92, 0
      %s95 = sadd.s32 %s94, 1
      %s96 = scalar_select %p93, %s94, %s95
      %p99 = pneg %p93
      %p100 = scmp.eq.s32.totalorder %s16, 3
      %p101 = por %p99, %p100
      %p102 = scmp.ne.s32.totalorder %s94, %s97
      %p103 = scmp.eq.s32.totalorder %s16, 0
      %p104 = por %p102, %p103
      %p105 = scmp.ne.s32.totalorder %s94, %s97
      %p106 = scmp.eq.s32.totalorder %s21, 3
      %p107 = por %p105, %p106
      %p108 = scmp.ne.s32.totalorder %s97, %s98
      %p109 = scmp.eq.s32.totalorder %s21, 0
      %p110 = por %p108, %p109
      %p111 = scmp.ne.s32.totalorder %s97, %s98
      %p112 = scmp.eq.s32.totalorder %s22, 3
      %p113 = por %p111, %p112
      %p115 = scmp.ne.s32.totalorder %s98, %s114
      %p116 = scmp.eq.s32.totalorder %s22, 0
      %p117 = por %p115, %p116
      %p118 = scmp.le.s32.totalorder 1, %s16
      %p119 = scmp.lt.s32.totalorder %s16, 5
      %p120 = pnand %p118, %p119
      %p121 = pneg %p120
      // Predicated region
      $region9: #{tpu_custom_call.1} parent=5 // pred_check
        _
      $region10: #{tpu_custom_call.1} parent=5 // pred_check_branch
        %123 = sbr.rel (%p120) target = $region12
      $region11: #{tpu_custom_call.1} parent=5 // pred_region
        %s124 = ssub.s32 %s16, 1
        // Predicated region
        $region13: #{tpu_custom_call.1} parent=11 // pred_check
          %p125 = pneg %p63
        $region14: #{tpu_custom_call.1} parent=11 // pred_check_branch
          %127 = sbr.rel (%p125) target = $region16
        $region15: #{tpu_custom_call.1} parent=11 // pred_region
          %129 = vsyncadd [#allocation7], 0
          %s130 = sshll.u32 %s1, 4
          %s131 = int_to_ptr.hbm [resolvable:$true] %s130
          %s132 = sshll.u32 [#allocation6], 4
          %s133 = int_to_ptr.vmem [resolvable:$true] %s132
          %138 = dma.hbm_to_vmem [thread:$0]  %s131, 3072, %s133, [#allocation7], 64, 64, 4
        $region16: #{tpu_custom_call.1} parent=11 // pred_fallthru
          _
        // Predicated region
        $region17: #{tpu_custom_call.1} parent=11 // pred_check
          %p139 = pneg %p84
        $region18: #{tpu_custom_call.1} parent=11 // pred_check_branch
          %141 = sbr.rel (%p139) target = $region20
        $region19: #{tpu_custom_call.1} parent=11 // pred_region
          %143 = vsyncadd [#allocation7], 0
          %s144 = sshll.u32 %s2, 4
          %s145 = int_to_ptr.hbm [resolvable:$true] %s144
          %s146 = sshll.u32 [#allocation8], 4
          %s147 = int_to_ptr.vmem [resolvable:$true] %s146
          %152 = dma.hbm_to_vmem [thread:$0]  %s145, 48, %s147, [#allocation7], 16, 16, 1
        $region20: #{tpu_custom_call.1} parent=11 // pred_fallthru
          _
      $region12: #{tpu_custom_call.1} parent=5 // pred_fallthru
        _
      %p153 = scmp.lt.s32.totalorder %s16, 4
      // Predicated region
      $region21: #{tpu_custom_call.1} parent=5 // pred_check
        %p154 = pneg %p153
      $region22: #{tpu_custom_call.1} parent=5 // pred_check_branch
        %156 = sbr.rel (%p154) target = $region24
      $region23: #{tpu_custom_call.1} parent=5 // pred_region
        // Predicated region
        $region25: #{tpu_custom_call.1} parent=23 // pred_check
          %p157 = pneg %p36
        $region26: #{tpu_custom_call.1} parent=23 // pred_check_branch
          %159 = sbr.rel (%p157) target = $region28
        $region27: #{tpu_custom_call.1} parent=23 // pred_region
          %s160 = sand.u32 %s26, 1
          %s161 = scalar_lea.sflag [#allocation4], %s160
          %s162 = sand.u32 %s26, 1
          %s163 = smul.addr %s162, 64
          %s164 = scalar_lea.vmem [#allocation3], %s163
          %s165 = smul.u32 16, %s16
          %167 = vsyncadd %s161, 0
          %s168 = smul.addr %s165, 4
          %s169 = scalar_lea.hbm %s0, %s168
          %s170 = sshll.u32 %s169, 4
          %s171 = int_to_ptr.hbm [resolvable:$true] %s170
          %s172 = sshll.u32 %s164, 4
          %s173 = int_to_ptr.vmem [resolvable:$true] %s172
          %178 = dma.hbm_to_vmem [thread:$0]  %s171, 1024, %s173, %s161, 64, 64, 4
        $region28: #{tpu_custom_call.1} parent=23 // pred_fallthru
          _
      $region24: #{tpu_custom_call.1} parent=5 // pred_fallthru
        _
      %p179 = scmp.le.s32.totalorder 1, %s16
      %p180 = scmp.lt.s32.totalorder %s16, 5
      %p181 = pnand %p179, %p180
      %p182 = pneg %p181
      // Predicated region
      $region29: #{tpu_custom_call.1} parent=5 // pred_check
        _
      $region30: #{tpu_custom_call.1} parent=5 // pred_check_branch
        %184 = sbr.rel (%p181) target = $region32
      $region31: #{tpu_custom_call.1} parent=5 // pred_region
        %s185 = ssub.s32 %s16, 1
        %s186 = sand.u32 %s29, 1
        %s187 = scalar_lea.sflag [#allocation4], %s186
        %s188 = sand.u32 %s29, 1
        %s189 = smul.addr %s188, 64
        %s190 = scalar_lea.vmem [#allocation3], %s189
        // Predicated region
        $region33: #{tpu_custom_call.1} parent=31 // pred_check
          %p191 = pneg %p42
        $region34: #{tpu_custom_call.1} parent=31 // pred_check_branch
          %193 = sbr.rel (%p191) target = $region36
        $region35: #{tpu_custom_call.1} parent=31 // pred_region
          %195 = dma.done %s187, 1024
        $region36: #{tpu_custom_call.1} parent=31 // pred_fallthru
          _
        // Predicated region
        $region37: #{tpu_custom_call.1} parent=31 // pred_check
          %p196 = pneg %p63
        $region38: #{tpu_custom_call.1} parent=31 // pred_check_branch
          %198 = sbr.rel (%p196) target = $region40
        $region39: #{tpu_custom_call.1} parent=31 // pred_region
          %200 = dma.done [#allocation7], 3072
        $region40: #{tpu_custom_call.1} parent=31 // pred_fallthru
          _
        // Predicated region
        $region41: #{tpu_custom_call.1} parent=31 // pred_check
          %p201 = pneg %p84
        $region42: #{tpu_custom_call.1} parent=31 // pred_check_branch
          %203 = sbr.rel (%p201) target = $region44
        $region43: #{tpu_custom_call.1} parent=31 // pred_region
          %205 = dma.done [#allocation7], 48
        $region44: #{tpu_custom_call.1} parent=31 // pred_fallthru
          _
        %s206 = sand.u32 %s29, 1
        %s207 = scalar_lea.sflag [#allocation4], %s206
        %s208 = sand.u32 %s29, 1
        %s209 = smul.addr %s208, 64
        %s210 = scalar_lea.vmem [#allocation3], %s209
        %p211 = pneg %p42
        %p212 = pneg %p39
        %p213 = pneg %p63
        %p214 = pneg %p60
        %p215 = pneg %p84
        %p216 = pneg %p81
        %p217 = pneg %p110
        %p218 = pneg %p107
        %s219 = sand.u32 %s97, 1
        %s220 = scalar_lea.sflag [#allocation5], %s219
        %s221 = sand.u32 %s97, 1
        %s222 = smul.addr %s221, 128
        %s223 = scalar_lea.vmem [#allocation9], %s222
        %s224 = smul.u32 16, %s21
        %s225 = smul.u32 16, %s21
        %v226 = vld [vmem:[%s190] sm:$0xf]
        %v227 = vld [vmem:[%s190 + $0x4] sm:$0xf]
        %v228 = vld [vmem:[%s190 + $0x8] sm:$0xf]
        %v229 = vld [vmem:[%s190 + $0xc] sm:$0xf]
        %v230 = vld [vmem:[%s190 + $0x10] sm:$0xf]
        %v231 = vld [vmem:[%s190 + $0x14] sm:$0xf]
        %v232 = vld [vmem:[%s190 + $0x18] sm:$0xf]
        %v233 = vld [vmem:[%s190 + $0x1c] sm:$0xf]
        %v234 = vld [vmem:[%s190 + $0x20] sm:$0xf]
        %v235 = vld [vmem:[%s190 + $0x24] sm:$0xf]
        %v236 = vld [vmem:[%s190 + $0x28] sm:$0xf]
        %v237 = vld [vmem:[%s190 + $0x2c] sm:$0xf]
        %v238 = vld [vmem:[%s190 + $0x30] sm:$0xf]
        %v239 = vld [vmem:[%s190 + $0x34] sm:$0xf]
        %v240 = vld [vmem:[%s190 + $0x38] sm:$0xf]
        %v241 = vld [vmem:[%s190 + $0x3c] sm:$0xf]
        %v242 = vld [vmem:[#allocation6] sm:$0xf]
        %v243 = vld [vmem:[#allocation6 + $0x4] sm:$0xf]
        %v244 = vld [vmem:[#allocation6 + $0x8] sm:$0xf]
        %v245 = vld [vmem:[#allocation6 + $0xc] sm:$0xf]
        %v246 = vld [vmem:[#allocation6 + $0x10] sm:$0xf]
        %v247 = vld [vmem:[#allocation6 + $0x14] sm:$0xf]
        %v248 = vld [vmem:[#allocation6 + $0x18] sm:$0xf]
        %v249 = vld [vmem:[#allocation6 + $0x1c] sm:$0xf]
        %v250 = vld [vmem:[#allocation6 + $0x20] sm:$0xf]
        %v251 = vld [vmem:[#allocation6 + $0x24] sm:$0xf]
        %v252 = vld [vmem:[#allocation6 + $0x28] sm:$0xf]
        %v253 = vld [vmem:[#allocation6 + $0x2c] sm:$0xf]
        %v254 = vld [vmem:[#allocation6 + $0x30] sm:$0xf]
        %v255 = vld [vmem:[#allocation6 + $0x34] sm:$0xf]
        %v256 = vld [vmem:[#allocation6 + $0x38] sm:$0xf]
        %v257 = vld [vmem:[#allocation6 + $0x3c] sm:$0xf]
        %v258 = vld [vmem:[#allocation8] sm:$0x1]
        %v260 = vperm.slane %v258, 0
        %v278 = vunpack.c.l.b16 %v226
        %v279 = vunpack.c.l.b16 %v227
        %v280 = vunpack.c.l.b16 %v228
        %v281 = vunpack.c.l.b16 %v229
        %v282 = vunpack.c.l.b16 %v230
        %v283 = vunpack.c.l.b16 %v231
        %v284 = vunpack.c.l.b16 %v232
        %v285 = vunpack.c.l.b16 %v233
        %v286 = vunpack.c.l.b16 %v234
        %v287 = vunpack.c.l.b16 %v235
        %v288 = vunpack.c.l.b16 %v236
        %v289 = vunpack.c.l.b16 %v237
        %v290 = vunpack.c.l.b16 %v238
        %v291 = vunpack.c.l.b16 %v239
        %v292 = vunpack.c.l.b16 %v240
        %v293 = vunpack.c.l.b16 %v241
        %v294 = vpack.c.b16 %v279, %v278
        %v295 = vpack.c.b16 %v281, %v280
        %v296 = vpack.c.b16 %v283, %v282
        %v297 = vpack.c.b16 %v285, %v284
        %v298 = vpack.c.b16 %v287, %v286
        %v299 = vpack.c.b16 %v289, %v288
        %v300 = vpack.c.b16 %v291, %v290
        %v301 = vpack.c.b16 %v293, %v292
        %v326 = vunpack.c.l.b16 %v242
        %v327 = vunpack.c.l.b16 %v243
        %v328 = vunpack.c.l.b16 %v244
        %v329 = vunpack.c.l.b16 %v245
        %v330 = vunpack.c.l.b16 %v246
        %v331 = vunpack.c.l.b16 %v247
        %v332 = vunpack.c.l.b16 %v248
        %v333 = vunpack.c.l.b16 %v249
        %v334 = vunpack.c.l.b16 %v250
        %v335 = vunpack.c.l.b16 %v251
        %v336 = vunpack.c.l.b16 %v252
        %v337 = vunpack.c.l.b16 %v253
        %v338 = vunpack.c.l.b16 %v254
        %v339 = vunpack.c.l.b16 %v255
        %v340 = vunpack.c.l.b16 %v256
        %v341 = vunpack.c.l.b16 %v257
        %v342 = vpack.c.b16 %v327, %v326
        %v343 = vpack.c.b16 %v329, %v328
        %v344 = vpack.c.b16 %v331, %v330
        %v345 = vpack.c.b16 %v333, %v332
        %v346 = vpack.c.b16 %v335, %v334
        %v347 = vpack.c.b16 %v337, %v336
        %v348 = vpack.c.b16 %v339, %v338
        %v349 = vpack.c.b16 %v341, %v340
        %358 = vmatpush.bf16.msra.mxu0 %v349
        %359 = vmatpush.bf16.msra.mxu0 %v348
        %360 = vmatpush.bf16.msra.mxu0 %v347
        %361 = vmatpush.bf16.msra.mxu0 %v346
        %362 = vmatpush.bf16.msra.mxu0 %v345
        %363 = vmatpush.bf16.msra.mxu0 %v344
        %364 = vmatpush.bf16.msra.mxu0 %v343
        %365 = vmatpush.bf16.msra.mxu0 %v342
        %366 = vmatmul.bf16.gmra.mxu0 %v294
        %v367 = vpop.f32.mrf.mxu0
        %v368 = vadd.f32 %v260, %v367
        %v369 = vpop.f32.mrf.mxu0
        %v370 = vadd.f32 %v260, %v369
        %371 = vmatmul.bf16.gmra.mxu0 %v295
        %v372 = vpop.f32.mrf.mxu0
        %v373 = vadd.f32 %v260, %v372
        %v374 = vpop.f32.mrf.mxu0
        %v375 = vadd.f32 %v260, %v374
        %376 = vmatmul.bf16.gmra.mxu0 %v296
        %v377 = vpop.f32.mrf.mxu0
        %v378 = vadd.f32 %v260, %v377
        %v379 = vpop.f32.mrf.mxu0
        %v380 = vadd.f32 %v260, %v379
        %381 = vmatmul.bf16.gmra.mxu0 %v297
        %v382 = vpop.f32.mrf.mxu0
        %v383 = vadd.f32 %v260, %v382
        %v384 = vpop.f32.mrf.mxu0
        %v385 = vadd.f32 %v260, %v384
        %386 = vmatmul.bf16.gmra.mxu0 %v298
        %v387 = vpop.f32.mrf.mxu0
        %v388 = vadd.f32 %v260, %v387
        %v389 = vpop.f32.mrf.mxu0
        %v390 = vadd.f32 %v260, %v389
        %391 = vmatmul.bf16.gmra.mxu0 %v299
        %v392 = vpop.f32.mrf.mxu0
        %v393 = vadd.f32 %v260, %v392
        %v394 = vpop.f32.mrf.mxu0
        %v395 = vadd.f32 %v260, %v394
        %396 = vmatmul.bf16.gmra.mxu0 %v300
        %v397 = vpop.f32.mrf.mxu0
        %v398 = vadd.f32 %v260, %v397
        %v399 = vpop.f32.mrf.mxu0
        %v400 = vadd.f32 %v260, %v399
        %401 = vmatmul.bf16.gmra.mxu0 %v301
        %v402 = vpop.f32.mrf.mxu0
        %v403 = vadd.f32 %v260, %v402
        %v404 = vpop.f32.mrf.mxu0
        %v405 = vadd.f32 %v260, %v404
        %406 = vdwg.mxu0
        %v407 = vpack.c.bf16 %v368, %v368
        %v408 = vpack.c.bf16 %v370, %v370
        %v409 = vpack.c.bf16 %v373, %v373
        %v410 = vpack.c.bf16 %v375, %v375
        %v411 = vpack.c.bf16 %v378, %v378
        %v412 = vpack.c.bf16 %v380, %v380
        %v413 = vpack.c.bf16 %v383, %v383
        %v414 = vpack.c.bf16 %v385, %v385
        %v415 = vpack.c.bf16 %v388, %v388
        %v416 = vpack.c.bf16 %v390, %v390
        %v417 = vpack.c.bf16 %v393, %v393
        %v418 = vpack.c.bf16 %v395, %v395
        %v419 = vpack.c.bf16 %v398, %v398
        %v420 = vpack.c.bf16 %v400, %v400
        %v421 = vpack.c.bf16 %v403, %v403
        %v422 = vpack.c.bf16 %v405, %v405
        %423 = vst [vmem:[#allocation2] sm:$0xf] %v407
        %424 = vst [vmem:[#allocation2 + $0x4] sm:$0xf] %v408
        %425 = vst [vmem:[#allocation2 + $0x8] sm:$0xf] %v409
        %426 = vst [vmem:[#allocation2 + $0xc] sm:$0xf] %v410
        %427 = vst [vmem:[#allocation2 + $0x10] sm:$0xf] %v411
        %428 = vst [vmem:[#allocation2 + $0x14] sm:$0xf] %v412
        %429 = vst [vmem:[#allocation2 + $0x18] sm:$0xf] %v413
        %430 = vst [vmem:[#allocation2 + $0x1c] sm:$0xf] %v414
        %431 = vst [vmem:[#allocation2 + $0x20] sm:$0xf] %v415
        %432 = vst [vmem:[#allocation2 + $0x24] sm:$0xf] %v416
        %433 = vst [vmem:[#allocation2 + $0x28] sm:$0xf] %v417
        %434 = vst [vmem:[#allocation2 + $0x2c] sm:$0xf] %v418
        %435 = vst [vmem:[#allocation2 + $0x30] sm:$0xf] %v419
        %436 = vst [vmem:[#allocation2 + $0x34] sm:$0xf] %v420
        %437 = vst [vmem:[#allocation2 + $0x38] sm:$0xf] %v421
        %438 = vst [vmem:[#allocation2 + $0x3c] sm:$0xf] %v422
        %v439 = vld [vmem:[#allocation2] sm:$0xf]
        %v440 = vld [vmem:[#allocation2 + $0x4] sm:$0xf]
        %v441 = vld [vmem:[#allocation2 + $0x8] sm:$0xf]
        %v442 = vld [vmem:[#allocation2 + $0xc] sm:$0xf]
        %v443 = vld [vmem:[#allocation2 + $0x10] sm:$0xf]
        %v444 = vld [vmem:[#allocation2 + $0x14] sm:$0xf]
        %v445 = vld [vmem:[#allocation2 + $0x18] sm:$0xf]
        %v446 = vld [vmem:[#allocation2 + $0x1c] sm:$0xf]
        %v447 = vld [vmem:[#allocation2 + $0x20] sm:$0xf]
        %v448 = vld [vmem:[#allocation2 + $0x24] sm:$0xf]
        %v449 = vld [vmem:[#allocation2 + $0x28] sm:$0xf]
        %v450 = vld [vmem:[#allocation2 + $0x2c] sm:$0xf]
        %v451 = vld [vmem:[#allocation2 + $0x30] sm:$0xf]
        %v452 = vld [vmem:[#allocation2 + $0x34] sm:$0xf]
        %v453 = vld [vmem:[#allocation2 + $0x38] sm:$0xf]
        %v454 = vld [vmem:[#allocation2 + $0x3c] sm:$0xf]
        %s455 = scalar_lea.vmem [#allocation6], 64
        %v456 = vld [vmem:[%s455] sm:$0xf]
        %v457 = vld [vmem:[%s455 + $0x4] sm:$0xf]
        %v458 = vld [vmem:[%s455 + $0x8] sm:$0xf]
        %v459 = vld [vmem:[%s455 + $0xc] sm:$0xf]
        %v460 = vld [vmem:[%s455 + $0x10] sm:$0xf]
        %v461 = vld [vmem:[%s455 + $0x14] sm:$0xf]
        %v462 = vld [vmem:[%s455 + $0x18] sm:$0xf]
        %v463 = vld [vmem:[%s455 + $0x1c] sm:$0xf]
        %v464 = vld [vmem:[%s455 + $0x20] sm:$0xf]
        %v465 = vld [vmem:[%s455 + $0x24] sm:$0xf]
        %v466 = vld [vmem:[%s455 + $0x28] sm:$0xf]
        %v467 = vld [vmem:[%s455 + $0x2c] sm:$0xf]
        %v468 = vld [vmem:[%s455 + $0x30] sm:$0xf]
        %v469 = vld [vmem:[%s455 + $0x34] sm:$0xf]
        %v470 = vld [vmem:[%s455 + $0x38] sm:$0xf]
        %v471 = vld [vmem:[%s455 + $0x3c] sm:$0xf]
        %s472 = scalar_lea.vmem [#allocation8], 1
        %v473 = vld [vmem:[%s472] sm:$0x1]
        %v475 = vperm.slane %v473, 0
        %v493 = vunpack.c.l.b16 %v439
        %v494 = vunpack.c.l.b16 %v440
        %v495 = vunpack.c.l.b16 %v441
        %v496 = vunpack.c.l.b16 %v442
        %v497 = vunpack.c.l.b16 %v443
        %v498 = vunpack.c.l.b16 %v444
        %v499 = vunpack.c.l.b16 %v445
        %v500 = vunpack.c.l.b16 %v446
        %v501 = vunpack.c.l.b16 %v447
        %v502 = vunpack.c.l.b16 %v448
        %v503 = vunpack.c.l.b16 %v449
        %v504 = vunpack.c.l.b16 %v450
        %v505 = vunpack.c.l.b16 %v451
        %v506 = vunpack.c.l.b16 %v452
        %v507 = vunpack.c.l.b16 %v453
        %v508 = vunpack.c.l.b16 %v454
        %v509 = vpack.c.b16 %v494, %v493
        %v510 = vpack.c.b16 %v496, %v495
        %v511 = vpack.c.b16 %v498, %v497
        %v512 = vpack.c.b16 %v500, %v499
        %v513 = vpack.c.b16 %v502, %v501
        %v514 = vpack.c.b16 %v504, %v503
        %v515 = vpack.c.b16 %v506, %v505
        %v516 = vpack.c.b16 %v508, %v507
        %v541 = vunpack.c.l.b16 %v456
        %v542 = vunpack.c.l.b16 %v457
        %v543 = vunpack.c.l.b16 %v458
        %v544 = vunpack.c.l.b16 %v459
        %v545 = vunpack.c.l.b16 %v460
        %v546 = vunpack.c.l.b16 %v461
        %v547 = vunpack.c.l.b16 %v462
        %v548 = vunpack.c.l.b16 %v463
        %v549 = vunpack.c.l.b16 %v464
        %v550 = vunpack.c.l.b16 %v465
        %v551 = vunpack.c.l.b16 %v466
        %v552 = vunpack.c.l.b16 %v467
        %v553 = vunpack.c.l.b16 %v468
        %v554 = vunpack.c.l.b16 %v469
        %v555 = vunpack.c.l.b16 %v470
        %v556 = vunpack.c.l.b16 %v471
        %v557 = vpack.c.b16 %v542, %v541
        %v558 = vpack.c.b16 %v544, %v543
        %v559 = vpack.c.b16 %v546, %v545
        %v560 = vpack.c.b16 %v548, %v547
        %v561 = vpack.c.b16 %v550, %v549
        %v562 = vpack.c.b16 %v552, %v551
        %v563 = vpack.c.b16 %v554, %v553
        %v564 = vpack.c.b16 %v556, %v555
        %573 = vmatpush.bf16.msra.mxu0 %v564
        %574 = vmatpush.bf16.msra.mxu0 %v563
        %575 = vmatpush.bf16.msra.mxu0 %v562
        %576 = vmatpush.bf16.msra.mxu0 %v561
        %577 = vmatpush.bf16.msra.mxu0 %v560
        %578 = vmatpush.bf16.msra.mxu0 %v559
        %579 = vmatpush.bf16.msra.mxu0 %v558
        %580 = vmatpush.bf16.msra.mxu0 %v557
        %581 = vmatmul.bf16.gmra.mxu0 %v509
        %v582 = vpop.f32.mrf.mxu0
        %v583 = vadd.f32 %v475, %v582
        %v584 = vpop.f32.mrf.mxu0
        %v585 = vadd.f32 %v475, %v584
        %586 = vmatmul.bf16.gmra.mxu0 %v510
        %v587 = vpop.f32.mrf.mxu0
        %v588 = vadd.f32 %v475, %v587
        %v589 = vpop.f32.mrf.mxu0
        %v590 = vadd.f32 %v475, %v589
        %591 = vmatmul.bf16.gmra.mxu0 %v511
        %v592 = vpop.f32.mrf.mxu0
        %v593 = vadd.f32 %v475, %v592
        %v594 = vpop.f32.mrf.mxu0
        %v595 = vadd.f32 %v475, %v594
        %596 = vmatmul.bf16.gmra.mxu0 %v512
        %v597 = vpop.f32.mrf.mxu0
        %v598 = vadd.f32 %v475, %v597
        %v599 = vpop.f32.mrf.mxu0
        %v600 = vadd.f32 %v475, %v599
        %601 = vmatmul.bf16.gmra.mxu0 %v513
        %v602 = vpop.f32.mrf.mxu0
        %v603 = vadd.f32 %v475, %v602
        %v604 = vpop.f32.mrf.mxu0
        %v605 = vadd.f32 %v475, %v604
        %606 = vmatmul.bf16.gmra.mxu0 %v514
        %v607 = vpop.f32.mrf.mxu0
        %v608 = vadd.f32 %v475, %v607
        %v609 = vpop.f32.mrf.mxu0
        %v610 = vadd.f32 %v475, %v609
        %611 = vmatmul.bf16.gmra.mxu0 %v515
        %v612 = vpop.f32.mrf.mxu0
        %v613 = vadd.f32 %v475, %v612
        %v614 = vpop.f32.mrf.mxu0
        %v615 = vadd.f32 %v475, %v614
        %616 = vmatmul.bf16.gmra.mxu0 %v516
        %v617 = vpop.f32.mrf.mxu0
        %v618 = vadd.f32 %v475, %v617
        %v619 = vpop.f32.mrf.mxu0
        %v620 = vadd.f32 %v475, %v619
        %621 = vdwg.mxu0
        %v622 = vpack.c.bf16 %v583, %v583
        %v623 = vpack.c.bf16 %v585, %v585
        %v624 = vpack.c.bf16 %v588, %v588
        %v625 = vpack.c.bf16 %v590, %v590
        %v626 = vpack.c.bf16 %v593, %v593
        %v627 = vpack.c.bf16 %v595, %v595
        %v628 = vpack.c.bf16 %v598, %v598
        %v629 = vpack.c.bf16 %v600, %v600
        %v630 = vpack.c.bf16 %v603, %v603
        %v631 = vpack.c.bf16 %v605, %v605
        %v632 = vpack.c.bf16 %v608, %v608
        %v633 = vpack.c.bf16 %v610, %v610
        %v634 = vpack.c.bf16 %v613, %v613
        %v635 = vpack.c.bf16 %v615, %v615
        %v636 = vpack.c.bf16 %v618, %v618
        %v637 = vpack.c.bf16 %v620, %v620
        %638 = vst [vmem:[#allocation2] sm:$0xf] %v622
        %639 = vst [vmem:[#allocation2 + $0x4] sm:$0xf] %v623
        %640 = vst [vmem:[#allocation2 + $0x8] sm:$0xf] %v624
        %641 = vst [vmem:[#allocation2 + $0xc] sm:$0xf] %v625
        %642 = vst [vmem:[#allocation2 + $0x10] sm:$0xf] %v626
        %643 = vst [vmem:[#allocation2 + $0x14] sm:$0xf] %v627
        %644 = vst [vmem:[#allocation2 + $0x18] sm:$0xf] %v628
        %645 = vst [vmem:[#allocation2 + $0x1c] sm:$0xf] %v629
        %646 = vst [vmem:[#allocation2 + $0x20] sm:$0xf] %v630
        %647 = vst [vmem:[#allocation2 + $0x24] sm:$0xf] %v631
        %648 = vst [vmem:[#allocation2 + $0x28] sm:$0xf] %v632
        %649 = vst [vmem:[#allocation2 + $0x2c] sm:$0xf] %v633
        %650 = vst [vmem:[#allocation2 + $0x30] sm:$0xf] %v634
        %651 = vst [vmem:[#allocation2 + $0x34] sm:$0xf] %v635
        %652 = vst [vmem:[#allocation2 + $0x38] sm:$0xf] %v636
        %653 = vst [vmem:[#allocation2 + $0x3c] sm:$0xf] %v637
        %v654 = vld [vmem:[#allocation2] sm:$0xf]
        %v655 = vld [vmem:[#allocation2 + $0x4] sm:$0xf]
        %v656 = vld [vmem:[#allocation2 + $0x8] sm:$0xf]
        %v657 = vld [vmem:[#allocation2 + $0xc] sm:$0xf]
        %v658 = vld [vmem:[#allocation2 + $0x10] sm:$0xf]
        %v659 = vld [vmem:[#allocation2 + $0x14] sm:$0xf]
        %v660 = vld [vmem:[#allocation2 + $0x18] sm:$0xf]
        %v661 = vld [vmem:[#allocation2 + $0x1c] sm:$0xf]
        %v662 = vld [vmem:[#allocation2 + $0x20] sm:$0xf]
        %v663 = vld [vmem:[#allocation2 + $0x24] sm:$0xf]
        %v664 = vld [vmem:[#allocation2 + $0x28] sm:$0xf]
        %v665 = vld [vmem:[#allocation2 + $0x2c] sm:$0xf]
        %v666 = vld [vmem:[#allocation2 + $0x30] sm:$0xf]
        %v667 = vld [vmem:[#allocation2 + $0x34] sm:$0xf]
        %v668 = vld [vmem:[#allocation2 + $0x38] sm:$0xf]
        %v669 = vld [vmem:[#allocation2 + $0x3c] sm:$0xf]
        %s670 = scalar_lea.vmem [#allocation6], 128
        %v671 = vld [vmem:[%s670] sm:$0xf]
        %v672 = vld [vmem:[%s670 + $0x4] sm:$0xf]
        %v673 = vld [vmem:[%s670 + $0x8] sm:$0xf]
        %v674 = vld [vmem:[%s670 + $0xc] sm:$0xf]
        %v675 = vld [vmem:[%s670 + $0x10] sm:$0xf]
        %v676 = vld [vmem:[%s670 + $0x14] sm:$0xf]
        %v677 = vld [vmem:[%s670 + $0x18] sm:$0xf]
        %v678 = vld [vmem:[%s670 + $0x1c] sm:$0xf]
        %v679 = vld [vmem:[%s670 + $0x20] sm:$0xf]
        %v680 = vld [vmem:[%s670 + $0x24] sm:$0xf]
        %v681 = vld [vmem:[%s670 + $0x28] sm:$0xf]
        %v682 = vld [vmem:[%s670 + $0x2c] sm:$0xf]
        %v683 = vld [vmem:[%s670 + $0x30] sm:$0xf]
        %v684 = vld [vmem:[%s670 + $0x34] sm:$0xf]
        %v685 = vld [vmem:[%s670 + $0x38] sm:$0xf]
        %v686 = vld [vmem:[%s670 + $0x3c] sm:$0xf]
        %s687 = scalar_lea.vmem [#allocation8], 2
        %v688 = vld [vmem:[%s687] sm:$0x1]
        %v690 = vperm.slane %v688, 0
        %v708 = vunpack.c.l.b16 %v654
        %v709 = vunpack.c.l.b16 %v655
        %v710 = vunpack.c.l.b16 %v656
        %v711 = vunpack.c.l.b16 %v657
        %v712 = vunpack.c.l.b16 %v658
        %v713 = vunpack.c.l.b16 %v659
        %v714 = vunpack.c.l.b16 %v660
        %v715 = vunpack.c.l.b16 %v661
        %v716 = vunpack.c.l.b16 %v662
        %v717 = vunpack.c.l.b16 %v663
        %v718 = vunpack.c.l.b16 %v664
        %v719 = vunpack.c.l.b16 %v665
        %v720 = vunpack.c.l.b16 %v666
        %v721 = vunpack.c.l.b16 %v667
        %v722 = vunpack.c.l.b16 %v668
        %v723 = vunpack.c.l.b16 %v669
        %v724 = vpack.c.b16 %v709, %v708
        %v725 = vpack.c.b16 %v711, %v710
        %v726 = vpack.c.b16 %v713, %v712
        %v727 = vpack.c.b16 %v715, %v714
        %v728 = vpack.c.b16 %v717, %v716
        %v729 = vpack.c.b16 %v719, %v718
        %v730 = vpack.c.b16 %v721, %v720
        %v731 = vpack.c.b16 %v723, %v722
        %v756 = vunpack.c.l.b16 %v671
        %v757 = vunpack.c.l.b16 %v672
        %v758 = vunpack.c.l.b16 %v673
        %v759 = vunpack.c.l.b16 %v674
        %v760 = vunpack.c.l.b16 %v675
        %v761 = vunpack.c.l.b16 %v676
        %v762 = vunpack.c.l.b16 %v677
        %v763 = vunpack.c.l.b16 %v678
        %v764 = vunpack.c.l.b16 %v679
        %v765 = vunpack.c.l.b16 %v680
        %v766 = vunpack.c.l.b16 %v681
        %v767 = vunpack.c.l.b16 %v682
        %v768 = vunpack.c.l.b16 %v683
        %v769 = vunpack.c.l.b16 %v684
        %v770 = vunpack.c.l.b16 %v685
        %v771 = vunpack.c.l.b16 %v686
        %v772 = vpack.c.b16 %v757, %v756
        %v773 = vpack.c.b16 %v759, %v758
        %v774 = vpack.c.b16 %v761, %v760
        %v775 = vpack.c.b16 %v763, %v762
        %v776 = vpack.c.b16 %v765, %v764
        %v777 = vpack.c.b16 %v767, %v766
        %v778 = vpack.c.b16 %v769, %v768
        %v779 = vpack.c.b16 %v771, %v770
        %788 = vmatpush.bf16.msra.mxu0 %v779
        %789 = vmatpush.bf16.msra.mxu0 %v778
        %790 = vmatpush.bf16.msra.mxu0 %v777
        %791 = vmatpush.bf16.msra.mxu0 %v776
        %792 = vmatpush.bf16.msra.mxu0 %v775
        %793 = vmatpush.bf16.msra.mxu0 %v774
        %794 = vmatpush.bf16.msra.mxu0 %v773
        %795 = vmatpush.bf16.msra.mxu0 %v772
        %796 = vmatmul.bf16.gmra.mxu0 %v724
        %v797 = vpop.f32.mrf.mxu0
        %v798 = vadd.f32 %v690, %v797
        %v799 = vpop.f32.mrf.mxu0
        %v800 = vadd.f32 %v690, %v799
        %801 = vmatmul.bf16.gmra.mxu0 %v725
        %v802 = vpop.f32.mrf.mxu0
        %v803 = vadd.f32 %v690, %v802
        %v804 = vpop.f32.mrf.mxu0
        %v805 = vadd.f32 %v690, %v804
        %806 = vmatmul.bf16.gmra.mxu0 %v726
        %v807 = vpop.f32.mrf.mxu0
        %v808 = vadd.f32 %v690, %v807
        %v809 = vpop.f32.mrf.mxu0
        %v810 = vadd.f32 %v690, %v809
        %811 = vmatmul.bf16.gmra.mxu0 %v727
        %v812 = vpop.f32.mrf.mxu0
        %v813 = vadd.f32 %v690, %v812
        %v814 = vpop.f32.mrf.mxu0
        %v815 = vadd.f32 %v690, %v814
        %816 = vmatmul.bf16.gmra.mxu0 %v728
        %v817 = vpop.f32.mrf.mxu0
        %v818 = vadd.f32 %v690, %v817
        %v819 = vpop.f32.mrf.mxu0
        %v820 = vadd.f32 %v690, %v819
        %821 = vmatmul.bf16.gmra.mxu0 %v729
        %v822 = vpop.f32.mrf.mxu0
        %v823 = vadd.f32 %v690, %v822
        %v824 = vpop.f32.mrf.mxu0
        %v825 = vadd.f32 %v690, %v824
        %826 = vmatmul.bf16.gmra.mxu0 %v730
        %v827 = vpop.f32.mrf.mxu0
        %v828 = vadd.f32 %v690, %v827
        %v829 = vpop.f32.mrf.mxu0
        %v830 = vadd.f32 %v690, %v829
        %831 = vmatmul.bf16.gmra.mxu0 %v731
        %v832 = vpop.f32.mrf.mxu0
        %v833 = vadd.f32 %v690, %v832
        %v834 = vpop.f32.mrf.mxu0
        %v835 = vadd.f32 %v690, %v834
        %836 = vdwg.mxu0
        %837 = vst [vmem:[%s223] sm:$0xff] %v798
        %838 = vst [vmem:[%s223 + $0x8] sm:$0xff] %v800
        %839 = vst [vmem:[%s223 + $0x10] sm:$0xff] %v803
        %840 = vst [vmem:[%s223 + $0x18] sm:$0xff] %v805
        %841 = vst [vmem:[%s223 + $0x20] sm:$0xff] %v808
        %842 = vst [vmem:[%s223 + $0x28] sm:$0xff] %v810
        %843 = vst [vmem:[%s223 + $0x30] sm:$0xff] %v813
        %844 = vst [vmem:[%s223 + $0x38] sm:$0xff] %v815
        %845 = vst [vmem:[%s223 + $0x40] sm:$0xff] %v818
        %846 = vst [vmem:[%s223 + $0x48] sm:$0xff] %v820
        %847 = vst [vmem:[%s223 + $0x50] sm:$0xff] %v823
        %848 = vst [vmem:[%s223 + $0x58] sm:$0xff] %v825
        %849 = vst [vmem:[%s223 + $0x60] sm:$0xff] %v828
        %850 = vst [vmem:[%s223 + $0x68] sm:$0xff] %v830
        %851 = vst [vmem:[%s223 + $0x70] sm:$0xff] %v833
        %852 = vst [vmem:[%s223 + $0x78] sm:$0xff] %v835
        %s853 = sand.u32 %s97, 1
        %s854 = scalar_lea.sflag [#allocation5], %s853
        %s855 = sand.u32 %s97, 1
        %s856 = smul.addr %s855, 128
        %s857 = scalar_lea.vmem [#allocation9], %s856
        // Predicated region
        $region45: #{tpu_custom_call.1} parent=31 // pred_check
          %p858 = pneg %p107
        $region46: #{tpu_custom_call.1} parent=31 // pred_check_branch
          %860 = sbr.rel (%p858) target = $region48
        $region47: #{tpu_custom_call.1} parent=31 // pred_region
          %s861 = smul.u32 16, %s21
          %863 = vsyncadd %s854, 0
          %s864 = smul.addr %s861, 8
          %s865 = scalar_lea.hbm %s3, %s864
          %s866 = sshll.u32 %s857, 4
          %s867 = int_to_ptr.vmem [resolvable:$true] %s866
          %s868 = sshll.u32 %s865, 4
          %s869 = int_to_ptr.hbm [resolvable:$true] %s868
          %874 = dma.vmem_to_hbm [thread:$0]  %s867, 2048, %s869, %s854, 128, 128, 8
        $region48: #{tpu_custom_call.1} parent=31 // pred_fallthru
          _
      $region32: #{tpu_custom_call.1} parent=5 // pred_fallthru
        _
      %p875 = scmp.le.s32.totalorder 2, %s16
      // Predicated region
      $region49: #{tpu_custom_call.1} parent=5 // pred_check
        %p876 = pneg %p875
      $region50: #{tpu_custom_call.1} parent=5 // pred_check_branch
        %878 = sbr.rel (%p876) target = $region52
      $region51: #{tpu_custom_call.1} parent=5 // pred_region
        %s879 = ssub.s32 %s16, 2
        // Predicated region
        $region53: #{tpu_custom_call.1} parent=51 // pred_check
          %p880 = pneg %p113
        $region54: #{tpu_custom_call.1} parent=51 // pred_check_branch
          %882 = sbr.rel (%p880) target = $region56
        $region55: #{tpu_custom_call.1} parent=51 // pred_region
          %s883 = sand.u32 %s98, 1
          %s884 = scalar_lea.sflag [#allocation5], %s883
          %s885 = sand.u32 %s98, 1
          %s886 = smul.addr %s885, 128
          %s887 = scalar_lea.vmem [#allocation9], %s886
          %889 = dma.done %s884, 2048
        $region56: #{tpu_custom_call.1} parent=51 // pred_fallthru
          _
      $region52: #{tpu_custom_call.1} parent=5 // pred_fallthru
        _
    $region6: #{tpu_custom_call.1} parent=1 // loop_footer
      %s20 = sadd.s32 1, %s16
    $region7: #{tpu_custom_call.1} parent=1 // loop_footer_branch
      %15 = sbr.rel target = $region3
    $region8: #{tpu_custom_call.1} parent=1 // loop_exit
      _
    %890 = vsyncpa [#allocation4], 1
    %s891 = scalar_lea.sflag [#allocation4], 1
    %892 = vsyncpa %s891, 1
    %893 = vsyncpa [#allocation7], 1
    %894 = vsyncpa [#allocation5], 1
    %s895 = scalar_lea.sflag [#allocation5], 1
    %896 = vsyncpa %s895, 1

</llo_original>
